<compile_context>
chip_gen: v7x
topology: tpu7x:2x2x1
jax: 0.10.0
libtpu: 0.0.40
codegen_flags: <defaults>
</compile_context>

<pallas_src>
import jax
import jax.numpy as jnp
from jax.experimental import pallas as pl
from jax.experimental.pallas import tpu as pltpu


def make_ontological_loss(lambda1: float, lambda2: float, lambda3: float):
    """Returns a callable computing the Ontological_Loss_Unweighted forward."""
    lam1 = float(lambda1)
    lam2 = float(lambda2)
    lam3 = float(lambda3)

    def loss_fn(embedding1, embedding2,
                out1_1, out1_2, out2_1, out2_2,
                target1_1, target1_2, target2_1, target2_2,
                pair_type):
        B, D = embedding1.shape
        C = out1_1.shape[1]
        f32 = jnp.float32

        inv_bc = 1.0 / float(B * C)   # turns elementwise sums into the 4 means
        inv_b = 1.0 / float(B)        # mean over D_w

        def kernel(o11, o21, o12, o22, t11, t21, t12, t22, e1, e2, pt, out_ref):
            def bwl_sum(x_ref, y_ref):
                # BCEWithLogitsLoss, numerically stable elementwise form.
                x = x_ref[...]
                y = y_ref[...]
                elem = (jnp.maximum(x, 0.0) - x * y
                        + jnp.log1p(jnp.exp(-jnp.abs(x))))
                return jnp.sum(elem)

            def bce_sum(p_ref, y_ref):
                # BCELoss with PyTorch's -100 clamp on the log terms.
                p = p_ref[...]
                y = y_ref[...]
                lp = jnp.maximum(jnp.log(p), -100.0)
                l1p = jnp.maximum(jnp.log(1.0 - p), -100.0)
                return jnp.sum(-(y * lp + (1.0 - y) * l1p))

            l1 = bwl_sum(o11, t11) + bwl_sum(o21, t21)   # sum == (L1_1+L1_2)*B*C
            l2 = bce_sum(o12, t12) + bce_sum(o22, t22)   # sum == (L2_1+L2_2)*B*C

            # Contrastive ontological distance term (VPU + XLU reduce only).
            diff = e1[...] - e2[...]                                  # (B, D)
            dist = jnp.sqrt(jnp.sum(diff * diff, axis=1, keepdims=True))  # (B, 1)
            dw = jnp.sum((dist - 2.0 * pt[...]) ** 2)                 # sum(D_w)

            out_ref[0, 0] = (lam1 * l1 * inv_bc
                             + lam2 * l2 * inv_bc
                             + lam3 * dw * inv_b)

        vmem_spec = pl.BlockSpec(memory_space=pltpu.MemorySpace.VMEM)
        bytes_accessed = (8 * B * C + 2 * B * D + B + 1) * 4

        out = pl.pallas_call(
            kernel,
            out_shape=jax.ShapeDtypeStruct((1, 1), jnp.float32),
            in_specs=[vmem_spec] * 11,
            out_specs=pl.BlockSpec(memory_space=pltpu.MemorySpace.SMEM),
            cost_estimate=pl.CostEstimate(
                flops=10 * B * C + 4 * B * D,
                transcendentals=8 * B * C + B,
                bytes_accessed=bytes_accessed),
        )(out1_1.astype(f32), out2_1.astype(f32),
          out1_2.astype(f32), out2_2.astype(f32),
          target1_1.astype(f32), target2_1.astype(f32),
          target1_2.astype(f32), target2_2.astype(f32),
          embedding1.astype(f32), embedding2.astype(f32),
          pair_type.astype(f32))
        return out[0, 0]

    return loss_fn


if __name__ == "__main__":
    # Deterministic lambdas (module takes them as constructor args).
    lambda1, lambda2, lambda3 = 1.0, 0.5, 0.25
    loss_fn = make_ontological_loss(lambda1, lambda2, lambda3)

    # Small shapes consistent with the forward pass.
    B, D, C = 8, 32, 16
    key = jax.random.PRNGKey(0)
    keys = jax.random.split(key, 11)

    embedding1 = jax.random.normal(keys[0], (B, D), dtype=jnp.float32)
    embedding2 = jax.random.normal(keys[1], (B, D), dtype=jnp.float32)

    out1_1 = jax.random.normal(keys[2], (B, C), dtype=jnp.float32)  # logits
    out2_1 = jax.random.normal(keys[3], (B, C), dtype=jnp.float32)  # logits
    out1_2 = jax.nn.sigmoid(jax.random.normal(keys[4], (B, C), dtype=jnp.float32))  # probs
    out2_2 = jax.nn.sigmoid(jax.random.normal(keys[5], (B, C), dtype=jnp.float32))  # probs

    target1_1 = jax.random.bernoulli(keys[6], 0.5, (B, C)).astype(jnp.float32)
    target1_2 = jax.random.bernoulli(keys[7], 0.5, (B, C)).astype(jnp.float32)
    target2_1 = jax.random.bernoulli(keys[8], 0.5, (B, C)).astype(jnp.float32)
    target2_2 = jax.random.bernoulli(keys[9], 0.5, (B, C)).astype(jnp.float32)

    # pair_type indexes into ontology_targets-like levels {0, 1, 2}
    pair_type = jax.random.randint(keys[10], (B, 1), 0, 3).astype(jnp.float32)

    loss = loss_fn(embedding1, embedding2,
                   out1_1, out1_2, out2_1, out2_2,
                   target1_1, target1_2, target2_1, target2_2,
                   pair_type)
    jax.block_until_ready(loss)

    # Pure-JAX reference check of the same semantics.
    def ref():
        def bwl(x, y):
            return jnp.mean(jnp.maximum(x, 0.0) - x * y
                            + jnp.log1p(jnp.exp(-jnp.abs(x))))

        def bce(p, y):
            lp = jnp.maximum(jnp.log(p), -100.0)
            l1p = jnp.maximum(jnp.log(1.0 - p), -100.0)
            return jnp.mean(-(y * lp + (1.0 - y) * l1p))

        L1 = bwl(out1_1, target1_1) + bwl(out2_1, target2_1)
        L2 = bce(out1_2, target1_2) + bce(out2_2, target2_2)
        dw = (jnp.sqrt(jnp.sum((embedding1 - embedding2) ** 2, axis=1))
              - pair_type[:, 0] * 2.0) ** 2
        return jnp.mean(lambda1 * L1 + lambda2 * L2 + lambda3 * dw)

    assert jnp.allclose(loss, ref(), rtol=1e-5, atol=1e-5)
    print("KERNEL_OK")
</pallas_src>

<mosaic_0001>
module attributes {stable_mosaic.version = 11 : i64} {
  func.func @kernel(%arg0: memref<8x16xf32, #tpu.memory_space<vmem>>, %arg1: memref<8x16xf32, #tpu.memory_space<vmem>>, %arg2: memref<8x16xf32, #tpu.memory_space<vmem>>, %arg3: memref<8x16xf32, #tpu.memory_space<vmem>>, %arg4: memref<8x16xf32, #tpu.memory_space<vmem>>, %arg5: memref<8x16xf32, #tpu.memory_space<vmem>>, %arg6: memref<8x16xf32, #tpu.memory_space<vmem>>, %arg7: memref<8x16xf32, #tpu.memory_space<vmem>>, %arg8: memref<8x32xf32, #tpu.memory_space<vmem>>, %arg9: memref<8x32xf32, #tpu.memory_space<vmem>>, %arg10: memref<8x1xf32, #tpu.memory_space<vmem>>, %arg11: memref<1x1xf32, #tpu.memory_space<smem>>) attributes {dimension_semantics = [], scalar_prefetch = 0 : i64, scratch_operands = 0 : i64, tpu.core_type = #tpu.core_type<tc>} {
    %c0 = arith.constant 0 : index
    %c0_0 = arith.constant 0 : index
    %0 = vector.load %arg0[%c0, %c0_0] : memref<8x16xf32, #tpu.memory_space<vmem>>, vector<8x16xf32>
    %c0_1 = arith.constant 0 : index
    %c0_2 = arith.constant 0 : index
    %1 = vector.load %arg4[%c0_1, %c0_2] : memref<8x16xf32, #tpu.memory_space<vmem>>, vector<8x16xf32>
    %cst = arith.constant 0.000000e+00 : f32
    %2 = vector.broadcast %cst : f32 to vector<8x16xf32>
    %3 = arith.maximumf %0, %2 : vector<8x16xf32>
    %4 = arith.mulf %0, %1 : vector<8x16xf32>
    %5 = arith.subf %3, %4 : vector<8x16xf32>
    %6 = math.absf %0 : vector<8x16xf32>
    %cst_3 = arith.constant 0.000000e+00 : f32
    %7 = vector.broadcast %cst_3 : f32 to vector<8x16xf32>
    %8 = arith.subf %7, %6 : vector<8x16xf32>
    %9 = math.exp %8 : vector<8x16xf32>
    %10 = math.log1p %9 : vector<8x16xf32>
    %11 = arith.addf %5, %10 : vector<8x16xf32>
    %12 = vector.shape_cast %11 : vector<8x16xf32> to vector<1x8x16xf32>
    %cst_4 = arith.constant dense<0.000000e+00> : vector<1xf32>
    %13 = vector.multi_reduction <add>, %12, %cst_4 [1, 2] : vector<1x8x16xf32> to vector<1xf32>
    %14 = vector.shape_cast %13 : vector<1xf32> to vector<1x1x1xf32>
    %15 = vector.extract %14[0, 0, 0] : f32 from vector<1x1x1xf32>
    %c0_5 = arith.constant 0 : index
    %c0_6 = arith.constant 0 : index
    %16 = vector.load %arg1[%c0_5, %c0_6] : memref<8x16xf32, #tpu.memory_space<vmem>>, vector<8x16xf32>
    %c0_7 = arith.constant 0 : index
    %c0_8 = arith.constant 0 : index
    %17 = vector.load %arg5[%c0_7, %c0_8] : memref<8x16xf32, #tpu.memory_space<vmem>>, vector<8x16xf32>
    %cst_9 = arith.constant 0.000000e+00 : f32
    %18 = vector.broadcast %cst_9 : f32 to vector<8x16xf32>
    %19 = arith.maximumf %16, %18 : vector<8x16xf32>
    %20 = arith.mulf %16, %17 : vector<8x16xf32>
    %21 = arith.subf %19, %20 : vector<8x16xf32>
    %22 = math.absf %16 : vector<8x16xf32>
    %cst_10 = arith.constant 0.000000e+00 : f32
    %23 = vector.broadcast %cst_10 : f32 to vector<8x16xf32>
    %24 = arith.subf %23, %22 : vector<8x16xf32>
    %25 = math.exp %24 : vector<8x16xf32>
    %26 = math.log1p %25 : vector<8x16xf32>
    %27 = arith.addf %21, %26 : vector<8x16xf32>
    %28 = vector.shape_cast %27 : vector<8x16xf32> to vector<1x8x16xf32>
    %cst_11 = arith.constant dense<0.000000e+00> : vector<1xf32>
    %29 = vector.multi_reduction <add>, %28, %cst_11 [1, 2] : vector<1x8x16xf32> to vector<1xf32>
    %30 = vector.shape_cast %29 : vector<1xf32> to vector<1x1x1xf32>
    %31 = vector.extract %30[0, 0, 0] : f32 from vector<1x1x1xf32>
    %32 = arith.addf %15, %31 : f32
    %c0_12 = arith.constant 0 : index
    %c0_13 = arith.constant 0 : index
    %33 = vector.load %arg2[%c0_12, %c0_13] : memref<8x16xf32, #tpu.memory_space<vmem>>, vector<8x16xf32>
    %c0_14 = arith.constant 0 : index
    %c0_15 = arith.constant 0 : index
    %34 = vector.load %arg6[%c0_14, %c0_15] : memref<8x16xf32, #tpu.memory_space<vmem>>, vector<8x16xf32>
    %35 = math.log %33 : vector<8x16xf32>
    %cst_16 = arith.constant -1.000000e+02 : f32
    %36 = vector.broadcast %cst_16 : f32 to vector<8x16xf32>
    %37 = arith.maximumf %35, %36 : vector<8x16xf32>
    %cst_17 = arith.constant 1.000000e+00 : f32
    %38 = vector.broadcast %cst_17 : f32 to vector<8x16xf32>
    %39 = arith.subf %38, %33 : vector<8x16xf32>
    %40 = math.log %39 : vector<8x16xf32>
    %cst_18 = arith.constant -1.000000e+02 : f32
    %41 = vector.broadcast %cst_18 : f32 to vector<8x16xf32>
    %42 = arith.maximumf %40, %41 : vector<8x16xf32>
    %43 = arith.mulf %34, %37 : vector<8x16xf32>
    %cst_19 = arith.constant 1.000000e+00 : f32
    %44 = vector.broadcast %cst_19 : f32 to vector<8x16xf32>
    %45 = arith.subf %44, %34 : vector<8x16xf32>
    %46 = arith.mulf %45, %42 : vector<8x16xf32>
    %47 = arith.addf %43, %46 : vector<8x16xf32>
    %cst_20 = arith.constant 0.000000e+00 : f32
    %48 = vector.broadcast %cst_20 : f32 to vector<8x16xf32>
    %49 = arith.subf %48, %47 : vector<8x16xf32>
    %50 = vector.shape_cast %49 : vector<8x16xf32> to vector<1x8x16xf32>
    %cst_21 = arith.constant dense<0.000000e+00> : vector<1xf32>
    %51 = vector.multi_reduction <add>, %50, %cst_21 [1, 2] : vector<1x8x16xf32> to vector<1xf32>
    %52 = vector.shape_cast %51 : vector<1xf32> to vector<1x1x1xf32>
    %53 = vector.extract %52[0, 0, 0] : f32 from vector<1x1x1xf32>
    %c0_22 = arith.constant 0 : index
    %c0_23 = arith.constant 0 : index
    %54 = vector.load %arg3[%c0_22, %c0_23] : memref<8x16xf32, #tpu.memory_space<vmem>>, vector<8x16xf32>
    %c0_24 = arith.constant 0 : index
    %c0_25 = arith.constant 0 : index
    %55 = vector.load %arg7[%c0_24, %c0_25] : memref<8x16xf32, #tpu.memory_space<vmem>>, vector<8x16xf32>
    %56 = math.log %54 : vector<8x16xf32>
    %cst_26 = arith.constant -1.000000e+02 : f32
    %57 = vector.broadcast %cst_26 : f32 to vector<8x16xf32>
    %58 = arith.maximumf %56, %57 : vector<8x16xf32>
    %cst_27 = arith.constant 1.000000e+00 : f32
    %59 = vector.broadcast %cst_27 : f32 to vector<8x16xf32>
    %60 = arith.subf %59, %54 : vector<8x16xf32>
    %61 = math.log %60 : vector<8x16xf32>
    %cst_28 = arith.constant -1.000000e+02 : f32
    %62 = vector.broadcast %cst_28 : f32 to vector<8x16xf32>
    %63 = arith.maximumf %61, %62 : vector<8x16xf32>
    %64 = arith.mulf %55, %58 : vector<8x16xf32>
    %cst_29 = arith.constant 1.000000e+00 : f32
    %65 = vector.broadcast %cst_29 : f32 to vector<8x16xf32>
    %66 = arith.subf %65, %55 : vector<8x16xf32>
    %67 = arith.mulf %66, %63 : vector<8x16xf32>
    %68 = arith.addf %64, %67 : vector<8x16xf32>
    %cst_30 = arith.constant 0.000000e+00 : f32
    %69 = vector.broadcast %cst_30 : f32 to vector<8x16xf32>
    %70 = arith.subf %69, %68 : vector<8x16xf32>
    %71 = vector.shape_cast %70 : vector<8x16xf32> to vector<1x8x16xf32>
    %cst_31 = arith.constant dense<0.000000e+00> : vector<1xf32>
    %72 = vector.multi_reduction <add>, %71, %cst_31 [1, 2] : vector<1x8x16xf32> to vector<1xf32>
    %73 = vector.shape_cast %72 : vector<1xf32> to vector<1x1x1xf32>
    %74 = vector.extract %73[0, 0, 0] : f32 from vector<1x1x1xf32>
    %75 = arith.addf %53, %74 : f32
    %c0_32 = arith.constant 0 : index
    %c0_33 = arith.constant 0 : index
    %76 = vector.load %arg8[%c0_32, %c0_33] : memref<8x32xf32, #tpu.memory_space<vmem>>, vector<8x32xf32>
    %c0_34 = arith.constant 0 : index
    %c0_35 = arith.constant 0 : index
    %77 = vector.load %arg9[%c0_34, %c0_35] : memref<8x32xf32, #tpu.memory_space<vmem>>, vector<8x32xf32>
    %78 = arith.subf %76, %77 : vector<8x32xf32>
    %79 = arith.mulf %78, %78 : vector<8x32xf32>
    %cst_36 = arith.constant dense<0.000000e+00> : vector<8xf32>
    %80 = vector.multi_reduction <add>, %79, %cst_36 [1] : vector<8x32xf32> to vector<8xf32>
    %81 = vector.shape_cast %80 : vector<8xf32> to vector<8x1xf32>
    %82 = math.sqrt %81 : vector<8x1xf32>
    %c0_37 = arith.constant 0 : index
    %c0_38 = arith.constant 0 : index
    %83 = vector.load %arg10[%c0_37, %c0_38] : memref<8x1xf32, #tpu.memory_space<vmem>>, vector<8x1xf32>
    %cst_39 = arith.constant 2.000000e+00 : f32
    %84 = vector.broadcast %cst_39 : f32 to vector<8x1xf32>
    %85 = arith.mulf %84, %83 : vector<8x1xf32>
    %86 = arith.subf %82, %85 : vector<8x1xf32>
    %87 = arith.mulf %86, %86 : vector<8x1xf32>
    %88 = vector.shape_cast %87 : vector<8x1xf32> to vector<1x8x1xf32>
    %cst_40 = arith.constant dense<0.000000e+00> : vector<1xf32>
    %89 = vector.multi_reduction <add>, %88, %cst_40 [1, 2] : vector<1x8x1xf32> to vector<1xf32>
    %90 = vector.shape_cast %89 : vector<1xf32> to vector<1x1x1xf32>
    %91 = vector.extract %90[0, 0, 0] : f32 from vector<1x1x1xf32>
    %cst_41 = arith.constant 1.000000e+00 : f32
    %92 = arith.mulf %cst_41, %32 : f32
    %cst_42 = arith.constant 7.812500e-03 : f32
    %93 = arith.mulf %92, %cst_42 : f32
    %cst_43 = arith.constant 5.000000e-01 : f32
    %94 = arith.mulf %cst_43, %75 : f32
    %cst_44 = arith.constant 7.812500e-03 : f32
    %95 = arith.mulf %94, %cst_44 : f32
    %96 = arith.addf %93, %95 : f32
    %cst_45 = arith.constant 2.500000e-01 : f32
    %97 = arith.mulf %cst_45, %91 : f32
    %cst_46 = arith.constant 1.250000e-01 : f32
    %98 = arith.mulf %97, %cst_46 : f32
    %99 = arith.addf %96, %98 : f32
    %c0_47 = arith.constant 0 : index
    %c0_48 = arith.constant 0 : index
    %100 = memref.load %arg11[%c0_47, %c0_48] : memref<1x1xf32, #tpu.memory_space<smem>>
    memref.store %99, %arg11[%c0_47, %c0_48] : memref<1x1xf32, #tpu.memory_space<smem>>
    return
  }
}

</mosaic_0001>

<llo_original>
// kernel: tpu_custom_call.1
$region0: #{tpu_custom_call.1}
  #allocation0 [shape = 'u32[]', space=smem, size = 0x4, offset = 0x4, fixed_abs, tag = 'smem constant byte address 0x4 - core index']
  #allocation1 [shape = 'u32[144,128]{1,0:T(1,128)}', space=vmem, size = 0x12000, scoped, tag = 'internal scratch']
  %s0 = inlined_call_operand.vmem [shape: f32[8,16], index: 0, kind: input, shape index: {}]
  %s1 = inlined_call_operand.hbm [shape: f32[8,16], index: 1, kind: input, shape index: {}]
  %s2 = inlined_call_operand.vmem [shape: f32[8,16], index: 2, kind: input, shape index: {}]
  %s3 = inlined_call_operand.hbm [shape: f32[8,16], index: 3, kind: input, shape index: {}]
  %s4 = inlined_call_operand.vmem [shape: f32[8,16], index: 4, kind: input, shape index: {}]
  %s5 = inlined_call_operand.hbm [shape: f32[8,16], index: 5, kind: input, shape index: {}]
  %s6 = inlined_call_operand.hbm [shape: f32[8,16], index: 6, kind: input, shape index: {}]
  %s7 = inlined_call_operand.vmem [shape: f32[8,16], index: 7, kind: input, shape index: {}]
  %s8 = inlined_call_operand.hbm [shape: f32[8,32], index: 8, kind: input, shape index: {}]
  %s9 = inlined_call_operand.vmem [shape: f32[8,32], index: 9, kind: input, shape index: {}]
  %s10 = inlined_call_operand.vmem [shape: f32[8,1], index: 10, kind: input, shape index: {}]
  %s11 = inlined_call_operand.hbm [shape: f32[1,1], index: 11, kind: output, shape index: {}]
  %s12 = sld [smem:[#allocation0]]
  $region74: #{tpu_custom_call.1} parent=0
    _
  %s14 = ssub.s32 1, %s12
  %s15 = scalar_select 0, %s14, %s12
  $region1: #{tpu_custom_call.1} parent=0
    #allocation2 [shape = 'u8[4096]{0}', space=vmem, size = 0x1000, scoped, tag = 'input window, operand 1, single buffered']
    #allocation3 [shape = 's32[1]{0}', space=sflag, size = 0x4, scoped, tag = 'scoped memory for tpu_custom_call.1']
    #allocation4 [shape = 's32[1]{0}', space=sflag, size = 0x4, scoped, tag = 'scoped memory for tpu_custom_call.1']
    #allocation5 [shape = 'u8[4096]{0}', space=vmem, size = 0x1000, scoped, tag = 'input window, operand 3, single buffered']
    #allocation6 [shape = 's32[1]{0}', space=sflag, size = 0x4, scoped, tag = 'scoped memory for tpu_custom_call.1']
    #allocation7 [shape = 'u8[4096]{0}', space=vmem, size = 0x1000, scoped, tag = 'input window, operand 5, single buffered']
    #allocation8 [shape = 'u8[4096]{0}', space=vmem, size = 0x1000, scoped, tag = 'input window, operand 6, single buffered']
    #allocation9 [shape = 's32[1]{0}', space=sflag, size = 0x4, scoped, tag = 'scoped memory for tpu_custom_call.1']
    #allocation10 [shape = 'u8[4096]{0}', space=vmem, size = 0x1000, scoped, tag = 'input window, operand 8, single buffered']
    #allocation11 [shape = 'u8[512]{0}', space=smem, size = 0x200, scoped, tag = 'output window, operand 0, single buffered']
    %16 = vsyncpa [#allocation3], 0
    %17 = vsyncpa [#allocation6], 0
    %18 = vsyncpa [#allocation9], 0
    %19 = vsyncpa [#allocation4], 0
    // Predicated region
    $region2: #{tpu_custom_call.1} parent=1 // pred_check
      _
    $region3: #{tpu_custom_call.1} parent=1 // pred_check_branch
      %21 = sbr.rel (0) target = $region5
    $region4: #{tpu_custom_call.1} parent=1 // pred_region
      _
    $region5: #{tpu_custom_call.1} parent=1 // pred_fallthru
      _
    // Predicated region
    $region6: #{tpu_custom_call.1} parent=1 // pred_check
      _
    $region7: #{tpu_custom_call.1} parent=1 // pred_check_branch
      %23 = sbr.rel (0) target = $region9
    $region8: #{tpu_custom_call.1} parent=1 // pred_region
      %s25 = ssub.s32 128, 128
      %26 = vsyncadd [#allocation3], %s25
      %s28 = sshll.u32 [#allocation2], 4
      %s29 = int_to_ptr.vmem [resolvable:$true] %s28
      %31 = dma.hbm_to_vmem [thread:$0]  %s1, 128, %s29, [#allocation3]
    $region9: #{tpu_custom_call.1} parent=1 // pred_fallthru
      _
    // Predicated region
    $region10: #{tpu_custom_call.1} parent=1 // pred_check
      _
    $region11: #{tpu_custom_call.1} parent=1 // pred_check_branch
      %33 = sbr.rel (0) target = $region13
    $region12: #{tpu_custom_call.1} parent=1 // pred_region
      _
    $region13: #{tpu_custom_call.1} parent=1 // pred_fallthru
      _
    // Predicated region
    $region14: #{tpu_custom_call.1} parent=1 // pred_check
      _
    $region15: #{tpu_custom_call.1} parent=1 // pred_check_branch
      %35 = sbr.rel (0) target = $region17
    $region16: #{tpu_custom_call.1} parent=1 // pred_region
      %s37 = ssub.s32 128, 128
      %38 = vsyncadd [#allocation6], %s37
      %s40 = sshll.u32 [#allocation5], 4
      %s41 = int_to_ptr.vmem [resolvable:$true] %s40
      %43 = dma.hbm_to_vmem [thread:$0]  %s3, 128, %s41, [#allocation6]
    $region17: #{tpu_custom_call.1} parent=1 // pred_fallthru
      _
    // Predicated region
    $region18: #{tpu_custom_call.1} parent=1 // pred_check
      _
    $region19: #{tpu_custom_call.1} parent=1 // pred_check_branch
      %45 = sbr.rel (0) target = $region21
    $region20: #{tpu_custom_call.1} parent=1 // pred_region
      _
    $region21: #{tpu_custom_call.1} parent=1 // pred_fallthru
      _
    // Predicated region
    $region22: #{tpu_custom_call.1} parent=1 // pred_check
      _
    $region23: #{tpu_custom_call.1} parent=1 // pred_check_branch
      %47 = sbr.rel (0) target = $region25
    $region24: #{tpu_custom_call.1} parent=1 // pred_region
      %s49 = ssub.s32 128, 128
      %50 = vsyncadd [#allocation6], %s49
      %s52 = sshll.u32 [#allocation7], 4
      %s53 = int_to_ptr.vmem [resolvable:$true] %s52
      %55 = dma.hbm_to_vmem [thread:$0]  %s5, 128, %s53, [#allocation6]
    $region25: #{tpu_custom_call.1} parent=1 // pred_fallthru
      _
    // Predicated region
    $region26: #{tpu_custom_call.1} parent=1 // pred_check
      _
    $region27: #{tpu_custom_call.1} parent=1 // pred_check_branch
      %57 = sbr.rel (0) target = $region29
    $region28: #{tpu_custom_call.1} parent=1 // pred_region
      %s59 = ssub.s32 128, 128
      %60 = vsyncadd [#allocation9], %s59
      %s62 = sshll.u32 [#allocation8], 4
      %s63 = int_to_ptr.vmem [resolvable:$true] %s62
      %65 = dma.hbm_to_vmem [thread:$0]  %s6, 128, %s63, [#allocation9]
    $region29: #{tpu_custom_call.1} parent=1 // pred_fallthru
      _
    // Predicated region
    $region30: #{tpu_custom_call.1} parent=1 // pred_check
      _
    $region31: #{tpu_custom_call.1} parent=1 // pred_check_branch
      %67 = sbr.rel (0) target = $region33
    $region32: #{tpu_custom_call.1} parent=1 // pred_region
      _
    $region33: #{tpu_custom_call.1} parent=1 // pred_fallthru
      _
    // Predicated region
    $region34: #{tpu_custom_call.1} parent=1 // pred_check
      _
    $region35: #{tpu_custom_call.1} parent=1 // pred_check_branch
      %69 = sbr.rel (0) target = $region37
    $region36: #{tpu_custom_call.1} parent=1 // pred_region
      %s71 = ssub.s32 128, 128
      %72 = vsyncadd [#allocation9], %s71
      %s74 = sshll.u32 [#allocation10], 4
      %s75 = int_to_ptr.vmem [resolvable:$true] %s74
      %77 = dma.hbm_to_vmem [thread:$0]  %s8, 128, %s75, [#allocation9]
    $region37: #{tpu_custom_call.1} parent=1 // pred_fallthru
      _
    // Predicated region
    $region38: #{tpu_custom_call.1} parent=1 // pred_check
      _
    $region39: #{tpu_custom_call.1} parent=1 // pred_check_branch
      %79 = sbr.rel (0) target = $region41
    $region40: #{tpu_custom_call.1} parent=1 // pred_region
      _
    $region41: #{tpu_custom_call.1} parent=1 // pred_fallthru
      _
    // Predicated region
    $region42: #{tpu_custom_call.1} parent=1 // pred_check
      _
    $region43: #{tpu_custom_call.1} parent=1 // pred_check_branch
      %81 = sbr.rel (0) target = $region45
    $region44: #{tpu_custom_call.1} parent=1 // pred_region
      _
    $region45: #{tpu_custom_call.1} parent=1 // pred_fallthru
      _
    // Predicated region
    $region46: #{tpu_custom_call.1} parent=1 // pred_check
      _
    $region47: #{tpu_custom_call.1} parent=1 // pred_check_branch
      %83 = sbr.rel (0) target = $region49
    $region48: #{tpu_custom_call.1} parent=1 // pred_region
      %84 = dma.done [#allocation3], 128
    $region49: #{tpu_custom_call.1} parent=1 // pred_fallthru
      _
    // Predicated region
    $region50: #{tpu_custom_call.1} parent=1 // pred_check
      _
    $region51: #{tpu_custom_call.1} parent=1 // pred_check_branch
      %86 = sbr.rel (0) target = $region53
    $region52: #{tpu_custom_call.1} parent=1 // pred_region
      %87 = dma.done [#allocation6], 128
    $region53: #{tpu_custom_call.1} parent=1 // pred_fallthru
      _
    // Predicated region
    $region54: #{tpu_custom_call.1} parent=1 // pred_check
      _
    $region55: #{tpu_custom_call.1} parent=1 // pred_check_branch
      %89 = sbr.rel (0) target = $region57
    $region56: #{tpu_custom_call.1} parent=1 // pred_region
      %90 = dma.done [#allocation6], 128
    $region57: #{tpu_custom_call.1} parent=1 // pred_fallthru
      _
    // Predicated region
    $region58: #{tpu_custom_call.1} parent=1 // pred_check
      _
    $region59: #{tpu_custom_call.1} parent=1 // pred_check_branch
      %92 = sbr.rel (0) target = $region61
    $region60: #{tpu_custom_call.1} parent=1 // pred_region
      %93 = dma.done [#allocation9], 128
    $region61: #{tpu_custom_call.1} parent=1 // pred_fallthru
      _
    // Predicated region
    $region62: #{tpu_custom_call.1} parent=1 // pred_check
      _
    $region63: #{tpu_custom_call.1} parent=1 // pred_check_branch
      %95 = sbr.rel (0) target = $region65
    $region64: #{tpu_custom_call.1} parent=1 // pred_region
      %96 = dma.done [#allocation9], 128
    $region65: #{tpu_custom_call.1} parent=1 // pred_fallthru
      _
    %v97 = vld [vmem:[%s0] sm:$0xff]
    %v98 = vld [vmem:[%s4] sm:$0xff]
    %v99 = vmax.f32 %v97, 0.0
    %v100 = vmul.f32 %v97, %v98
    %v101 = vsub.f32 %v99, %v100
    %v102 = vand.u32 2147483647, %v97
    %v103 = vsub.f32 0.0, %v102
    %v104 = vmul.f32 %v103, 1.442695
    %v105 = vpow.pop %v104
    %v106 = vadd.f32 %v105, 1.0
    %v107 = vlog2.pop %v106
    %v108 = vmul.f32 %v107, 0.6931472
    %v109 = vmul.f32 -0.5, %v105
    %v110 = vadd.f32 %v109, 1.0
    %v111 = vmul.f32 %v110, %v105
    %v112 = vand.u32 2147483647, %v105
    %vm113 = vcmp.lt.f32.partialorder %v112, 0.0004427343
    %v114 = vsel %vm113, %v111, %v108
    %v115 = vadd.f32 %v101, %v114
    %vm116 = vcmask 130048
    %v117 = vsel %vm116, %v115, 0.0
    %118 = vadd.xlane.f32.xlu0 %v117
    %v119 = vpop.xlane.xlu0 %118
    %v120 = vrot.slane %v119, 4
    %v121 = vadd.f32 %v119, %v120
    %v122 = vrot.slane %v121, 2
    %v123 = vadd.f32 %v121, %v122
    %v124 = vrot.slane %v123, 1
    %v125 = vadd.f32 %v123, %v124
    %s126 = vtos %v125
    %v127 = vld [vmem:[#allocation2] sm:$0xff]
    %v128 = vld [vmem:[#allocation7] sm:$0xff]
    %v129 = vmax.f32 %v127, 0.0
    %v130 = vmul.f32 %v127, %v128
    %v131 = vsub.f32 %v129, %v130
    %v132 = vand.u32 2147483647, %v127
    %v133 = vsub.f32 0.0, %v132
    %v134 = vmul.f32 %v133, 1.442695
    %v135 = vpow.pop %v134
    %v136 = vadd.f32 %v135, 1.0
    %v137 = vlog2.pop %v136
    %v138 = vmul.f32 %v137, 0.6931472
    %v139 = vmul.f32 -0.5, %v135
    %v140 = vadd.f32 %v139, 1.0
    %v141 = vmul.f32 %v140, %v135
    %v142 = vand.u32 2147483647, %v135
    %vm143 = vcmp.lt.f32.partialorder %v142, 0.0004427343
    %v144 = vsel %vm143, %v141, %v138
    %v145 = vadd.f32 %v131, %v144
    %v146 = vsel %vm116, %v145, 0.0
    %147 = vadd.xlane.f32.xlu0 %v146
    %v148 = vpop.xlane.xlu0 %147
    %v149 = vrot.slane %v148, 4
    %v150 = vadd.f32 %v148, %v149
    %v151 = vrot.slane %v150, 2
    %v152 = vadd.f32 %v150, %v151
    %v153 = vrot.slane %v152, 1
    %v154 = vadd.f32 %v152, %v153
    %s155 = vtos %v154
    %s156 = sadd.f32 %s126, %s155
    %v157 = vld [vmem:[%s2] sm:$0xff]
    %v158 = vld [vmem:[#allocation8] sm:$0xff]
    %v159 = vlog2.pop %v157
    %v160 = vmul.f32 %v159, 0.6931472
    %v161 = vmax.f32 %v160, -100.0
    %v162 = vsub.f32 1.0, %v157
    %v163 = vlog2.pop %v162
    %v164 = vmul.f32 %v163, 0.6931472
    %v165 = vmax.f32 %v164, -100.0
    %v166 = vmul.f32 %v158, %v161
    %v167 = vsub.f32 1.0, %v158
    %v168 = vmul.f32 %v167, %v165
    %v169 = vadd.f32 %v166, %v168
    %v170 = vsub.f32 0.0, %v169
    %v171 = vsel %vm116, %v170, 0.0
    %172 = vadd.xlane.f32.xlu0 %v171
    %v173 = vpop.xlane.xlu0 %172
    %v174 = vrot.slane %v173, 4
    %v175 = vadd.f32 %v173, %v174
    %v176 = vrot.slane %v175, 2
    %v177 = vadd.f32 %v175, %v176
    %v178 = vrot.slane %v177, 1
    %v179 = vadd.f32 %v177, %v178
    %s180 = vtos %v179
    %v181 = vld [vmem:[#allocation5] sm:$0xff]
    %v182 = vld [vmem:[%s7] sm:$0xff]
    %v183 = vlog2.pop %v181
    %v184 = vmul.f32 %v183, 0.6931472
    %v185 = vmax.f32 %v184, -100.0
    %v186 = vsub.f32 1.0, %v181
    %v187 = vlog2.pop %v186
    %v188 = vmul.f32 %v187, 0.6931472
    %v189 = vmax.f32 %v188, -100.0
    %v190 = vmul.f32 %v182, %v185
    %v191 = vsub.f32 1.0, %v182
    %v192 = vmul.f32 %v191, %v189
    %v193 = vadd.f32 %v190, %v192
    %v194 = vsub.f32 0.0, %v193
    %v195 = vsel %vm116, %v194, 0.0
    %196 = vadd.xlane.f32.xlu0 %v195
    %v197 = vpop.xlane.xlu0 %196
    %v198 = vrot.slane %v197, 4
    %v199 = vadd.f32 %v197, %v198
    %v200 = vrot.slane %v199, 2
    %v201 = vadd.f32 %v199, %v200
    %v202 = vrot.slane %v201, 1
    %v203 = vadd.f32 %v201, %v202
    %s204 = vtos %v203
    %s205 = sadd.f32 %s180, %s204
    %v206 = vld [vmem:[#allocation10] sm:$0xff]
    %v207 = vld [vmem:[%s9] sm:$0xff]
    %v208 = vsub.f32 %v206, %v207
    %v209 = vmul.f32 %v208, %v208
    %vm210 = vcmask 261120
    %v211 = vsel %vm210, %v209, 0.0
    %212 = vadd.xlane.f32.xlu0 %v211
    %v213 = vpop.xlane.xlu0 %212
    %v214 = vrsqrt.pop %v213
    %v215 = vmul.f32 %v213, %v214
    %vm216 = vcmp.eq.f32.partialorder %v213, inf
    %v217 = vsel %vm216, %v213, %v215
    %vm218 = vcmp.eq.f32.partialorder %v213, 0.0
    %v219 = vand.u32 %v213, 2147483648
    %v220 = vsel %vm218, %v219, %v217
    %v221 = vld [vmem:[%s10] sm:$0xff]
    %v222 = vmul.f32 %v221, 2.0
    %v223 = vsub.f32 %v220, %v222
    %v224 = vmul.f32 %v223, %v223
    %vm225 = vcmask 7168
    %v226 = vsel %vm225, %v224, 0.0
    %227 = vadd.xlane.f32.xlu0 %v226
    %v228 = vpop.xlane.xlu0 %227
    %v229 = vrot.slane %v228, 4
    %v230 = vadd.f32 %v228, %v229
    %v231 = vrot.slane %v230, 2
    %v232 = vadd.f32 %v230, %v231
    %v233 = vrot.slane %v232, 1
    %v234 = vadd.f32 %v232, %v233
    %s235 = vtos %v234
    %s236 = smul.f32 %s156, 0.0078125
    %s237 = smul.f32 %s205, 0.5
    %s238 = smul.f32 %s237, 0.0078125
    %s239 = sadd.f32 %s236, %s238
    %s240 = smul.f32 %s235, 0.25
    %s241 = smul.f32 %s240, 0.125
    %s242 = sadd.f32 %s239, %s241
    %s243 = scalar_lea.smem [#allocation11], 0
    %244 = sst [smem:[%s243]] %s242
    // Predicated region
    $region66: #{tpu_custom_call.1} parent=1 // pred_check
      _
    $region67: #{tpu_custom_call.1} parent=1 // pred_check_branch
      %246 = sbr.rel (0) target = $region69
    $region68: #{tpu_custom_call.1} parent=1 // pred_region
      %s248 = ssub.s32 16, 16
      %249 = vsyncadd [#allocation4], %s248
      %252 = dma.smem_to_hbm [#allocation11], 16, %s11, [#allocation4]
    $region69: #{tpu_custom_call.1} parent=1 // pred_fallthru
      _
    // Predicated region
    $region70: #{tpu_custom_call.1} parent=1 // pred_check
      _
    $region71: #{tpu_custom_call.1} parent=1 // pred_check_branch
      %254 = sbr.rel (0) target = $region73
    $region72: #{tpu_custom_call.1} parent=1 // pred_region
      %255 = dma.done [#allocation4], 16
    $region73: #{tpu_custom_call.1} parent=1 // pred_fallthru
      _
    %256 = sfence
    %257 = vsyncpa [#allocation3], 1
    %258 = vsyncpa [#allocation6], 1
    %259 = vsyncpa [#allocation9], 1
    %260 = vsyncpa [#allocation4], 1

</llo_original>
